<compile_context>
chip_gen: v6e
topology: v6e:2x2x1
jax: 0.10.0
libtpu: 0.0.40
codegen_flags: <defaults>
</compile_context>

<pallas_src>
import functools

import jax
import jax.numpy as jnp
from jax.experimental import pallas as pl
from jax.experimental.pallas import tpu as pltpu


LANE = 128          # vreg lane width / MXU tile edge
SUBLANE = 8         # f32 sublane count
BATCH_ALIGN = 16    # batch-tile alignment (bf16 output packs 16 rows/sublane tile)
MAX_BATCH_TILE = 2048


def _round_up(x, m):
    return ((x + m - 1) // m) * m


def _pad2(a, rows, cols, dtype):
    r, c = a.shape
    return jnp.pad(a, ((0, rows - r), (0, cols - c))).astype(dtype)


# ---------------------------------------------------------------------------
# Kernel
# ---------------------------------------------------------------------------
def actor_mlp_kernel(obs_ref, w1_ref, b1_ref, w2_ref, b2_ref, w3_ref, b3_ref,
                     out_ref):
    """Fused MLP trunk (Linear->ReLU)x2 -> Linear on one batch tile.

    Matmul inputs are bf16 (MXU-native); accumulation, bias add and ReLU in
    f32. Logits are stored as bf16 (lane-dense output block).
    """
    x = obs_ref[...].astype(jnp.bfloat16)

    h = jnp.dot(x, w1_ref[...], preferred_element_type=jnp.float32)
    h = jnp.maximum(h + b1_ref[...], 0.0)

    h = jnp.dot(h.astype(jnp.bfloat16), w2_ref[...],
                preferred_element_type=jnp.float32)
    h = jnp.maximum(h + b2_ref[...], 0.0)

    y = jnp.dot(h.astype(jnp.bfloat16), w3_ref[...],
                preferred_element_type=jnp.float32)
    out_ref[...] = (y + b3_ref[...]).astype(out_ref.dtype)


# ---------------------------------------------------------------------------
# Import-time feature detection: single-buffered constant blocks
# ---------------------------------------------------------------------------
def _detect_single_buffer_support():
    """Detect pl.Buffered(1) once by lowering+compiling a tiny pallas_call that
    mirrors the real usage (pinned constant block, grid > 1)."""
    try:
        def _copy(x_ref, o_ref):
            o_ref[...] = x_ref[...]

        fn = pl.pallas_call(
            _copy,
            out_shape=jax.ShapeDtypeStruct((16, 128), jnp.float32),
            grid=(2,),
            in_specs=[pl.BlockSpec((8, 128), lambda i: (0, 0),
                                   pipeline_mode=pl.Buffered(1))],
            out_specs=pl.BlockSpec((8, 128), lambda i: (i, 0)),
        )
        jax.jit(fn).lower(
            jax.ShapeDtypeStruct((8, 128), jnp.float32)).compile()
        return True
    except Exception:
        return False


_HAS_SINGLE_BUFFER = _detect_single_buffer_support()


# ---------------------------------------------------------------------------
# Wrapper helpers
# ---------------------------------------------------------------------------
def prepare_params(params):
    """Pad hidden/action dims to multiples of 128 (lane-dense) and cast weights
    to bf16; obs-facing rows of w1 keep their native width.

    Zero padding is exact: padded hidden units get bias 0 and ReLU(0)=0, and
    padded rows/cols of downstream weights are 0, so un-padded logits are
    unchanged.
    """
    obs_dim, hidden_dim = params["w1"].shape
    action_dim = params["w3"].shape[1]
    hp = _round_up(hidden_dim, LANE)
    ap = _round_up(action_dim, LANE)
    return dict(
        w1=_pad2(params["w1"], obs_dim, hp, jnp.bfloat16),
        b1=_pad2(params["b1"], 1, hp, jnp.float32),
        w2=_pad2(params["w2"], hp, hp, jnp.bfloat16),
        b2=_pad2(params["b2"], 1, hp, jnp.float32),
        w3=_pad2(params["w3"], hp, ap, jnp.bfloat16),
        b3=_pad2(params["b3"], 1, ap, jnp.float32),
    )


def _pick_batch_tile(batch):
    """Multiple of 16; aims for >=2 grid steps (so both v7x TensorCores get a
    step) with minimal row padding; capped at 2048 so per-grid-step overhead
    (~0.35us) is amortized without blowing VMEM."""
    if batch <= 2 * BATCH_ALIGN:
        return BATCH_ALIGN
    tb = _round_up(pl.cdiv(batch, 2), BATCH_ALIGN)
    return min(tb, MAX_BATCH_TILE)


def _vmem_capacity_bytes():
    try:
        return int(pltpu.get_tpu_info().vmem_capacity_bytes)
    except Exception:
        return 128 * 1024 * 1024   # v5e/v6e physical; v7x handled via 0.75x cap


def _vmem_limit_bytes(tb, kd, hp, ap):
    """Generation-aware scoped-VMEM budget, including intermediate activations."""
    weight_copies = 1 if _HAS_SINGLE_BUFFER else 2
    weight_bytes = (kd * hp + hp * hp + hp * ap) * 2 + (2 * hp + ap) * 4
    io_bytes = 2 * (tb * kd * 4 + tb * ap * 2)          # double-buffered obs/logits tiles
    act_bytes = 2 * tb * hp * 4 + 2 * tb * hp * 2 + tb * ap * 4  # h f32 x2 + bf16 copies + y
    need = weight_copies * weight_bytes + io_bytes + act_bytes
    cap = int(0.75 * _vmem_capacity_bytes())            # ~48 MiB v7x, ~96 MiB v5e/v6e
    return min(cap, max(32 * 1024 * 1024, int(need * 1.5)))


def _build_call(B_pad, tb, kd, hp, ap, vmem_limit):
    if _HAS_SINGLE_BUFFER:
        # Constant blocks (index pinned to (0,0)) never need double buffering.
        const_kwargs = dict(pipeline_mode=pl.Buffered(1))
    else:
        const_kwargs = {}

    def const_spec(shape):
        return pl.BlockSpec(shape, lambda i: (0, 0), **const_kwargs)

    flops = 2 * B_pad * (kd * hp + hp * hp + hp * ap)
    bytes_accessed = (
        B_pad * kd * 4                             # obs (f32, native width)
        + (kd * hp + hp * hp + hp * ap) * 2        # weights (bf16)
        + (2 * hp + ap) * 4                        # biases (f32)
        + B_pad * ap * 2                           # logits (bf16)
    )

    return pl.pallas_call(
        actor_mlp_kernel,
        out_shape=jax.ShapeDtypeStruct((B_pad, ap), jnp.bfloat16),
        grid_spec=pltpu.PrefetchScalarGridSpec(
            num_scalar_prefetch=0,
            grid=(B_pad // tb,),
            in_specs=[
                pl.BlockSpec((tb, kd), lambda i: (i, 0)),   # obs batch tile
                const_spec((kd, hp)),                       # w1
                const_spec((1, hp)),                        # b1
                const_spec((hp, hp)),                       # w2
                const_spec((1, hp)),                        # b2
                const_spec((hp, ap)),                       # w3
                const_spec((1, ap)),                        # b3
            ],
            out_specs=pl.BlockSpec((tb, ap), lambda i: (i, 0)),
        ),
        compiler_params=pltpu.CompilerParams(
            dimension_semantics=("parallel",),
            vmem_limit_bytes=vmem_limit),
        cost_estimate=pl.CostEstimate(
            flops=flops, transcendentals=0, bytes_accessed=bytes_accessed),
    )


@functools.partial(jax.jit, static_argnames=("action_dim", "batch_tile"))
def categorical_actor_forward(obs, prepared, *, action_dim, batch_tile=None):
    """obs: (B, obs_dim) float32; prepared: output of prepare_params.

    Returns logits of shape (B, action_dim), float32. The whole pad ->
    pallas_call -> slice -> cast pipeline is jit-compiled and cached.
    """
    B, obs_dim = obs.shape
    kd, hp = prepared["w1"].shape
    ap = prepared["w3"].shape[1]
    assert kd == obs_dim, "prepared params do not match obs feature dim"
    assert ap >= action_dim

    tb = batch_tile if batch_tile is not None else _pick_batch_tile(B)
    assert tb % BATCH_ALIGN == 0, "batch_tile must be a multiple of 16"
    B_pad = _round_up(B, tb)

    # Pad only batch rows (feature axis stays at native width).
    obs_p = obs if B_pad == B else jnp.pad(obs, ((0, B_pad - B), (0, 0)))

    call = _build_call(B_pad, tb, kd, hp, ap,
                       vmem_limit=_vmem_limit_bytes(tb, kd, hp, ap))
    out_p = call(obs_p, prepared["w1"], prepared["b1"], prepared["w2"],
                 prepared["b2"], prepared["w3"], prepared["b3"])
    return out_p[:B, :action_dim].astype(jnp.float32)


# ---------------------------------------------------------------------------
# Init + references
# ---------------------------------------------------------------------------
def init_params(key, obs_dim, hidden_dim, action_dim):
    """nn.Linear-style init U(-1/sqrt(fan_in), 1/sqrt(fan_in)); weights stored
    transposed to (in, out), biases as (1, out)."""
    ks = jax.random.split(key, 6)

    def lin(kw, kb, fan_in, fan_out):
        bound = 1.0 / jnp.sqrt(fan_in)
        w = jax.random.uniform(kw, (fan_in, fan_out), jnp.float32, -bound, bound)
        b = jax.random.uniform(kb, (1, fan_out), jnp.float32, -bound, bound)
        return w, b

    w1, b1 = lin(ks[0], ks[1], obs_dim, hidden_dim)
    w2, b2 = lin(ks[2], ks[3], hidden_dim, hidden_dim)
    w3, b3 = lin(ks[4], ks[5], hidden_dim, action_dim)
    return dict(w1=w1, b1=b1, w2=w2, b2=b2, w3=w3, b3=b3)


def reference_forward_bf16(obs, p):
    """Matches kernel matmul numerics: bf16 inputs, f32 accum / bias / ReLU."""
    def dense(x, w, b):
        return jnp.dot(x.astype(jnp.bfloat16), w.astype(jnp.bfloat16),
                       preferred_element_type=jnp.float32) + b
    h = jnp.maximum(dense(obs, p["w1"], p["b1"]), 0.0)
    h = jnp.maximum(dense(h, p["w2"], p["b2"]), 0.0)
    return dense(h, p["w3"], p["b3"])


def reference_forward_f32(obs, p):
    h = jnp.maximum(obs @ p["w1"] + p["b1"], 0.0)
    h = jnp.maximum(h @ p["w2"] + p["b2"], 0.0)
    return h @ p["w3"] + p["b3"]


if __name__ == "__main__":
    # Small shapes consistent with the module: hidden_depth=2 MLP policy head.
    batch, obs_dim, hidden_dim, action_dim = 8, 32, 64, 6

    key = jax.random.PRNGKey(0)
    k_obs, k_par = jax.random.split(key)

    obs = jax.random.normal(k_obs, (batch, obs_dim), jnp.float32)
    params = init_params(k_par, obs_dim, hidden_dim, action_dim)
    prepared = prepare_params(params)

    logits = categorical_actor_forward(obs, prepared, action_dim=action_dim)
    logits = jax.block_until_ready(logits)

    assert logits.shape == (batch, action_dim)
    ref_bf16 = reference_forward_bf16(obs, params)
    ref_f32 = reference_forward_f32(obs, params)
    # Kernel stores logits as bf16 (halved output stream), so allow the final
    # bf16 rounding on top of bf16-matmul numerics.
    assert jnp.allclose(logits, ref_bf16, atol=1e-2, rtol=1e-2), \
        "mismatch vs bf16-matmul reference"
    assert jnp.allclose(logits, ref_f32, atol=6e-2, rtol=0.0), \
        "mismatch vs f32 reference"

    print("KERNEL_OK")
</pallas_src>

<mosaic_0001>
module attributes {stable_mosaic.version = 11 : i64} {
  func.func @actor_mlp_kernel(%arg0: i32, %arg1: memref<16x32xf32, #tpu.memory_space<vmem>>, %arg2: memref<32x128xbf16, #tpu.memory_space<vmem>>, %arg3: memref<1x128xf32, #tpu.memory_space<vmem>>, %arg4: memref<128x128xbf16, #tpu.memory_space<vmem>>, %arg5: memref<1x128xf32, #tpu.memory_space<vmem>>, %arg6: memref<128x128xbf16, #tpu.memory_space<vmem>>, %arg7: memref<1x128xf32, #tpu.memory_space<vmem>>, %arg8: memref<16x128xbf16, #tpu.memory_space<vmem>>) attributes {dimension_semantics = [#tpu.dimension_semantics<parallel>], iteration_bounds = array<i64: 1>, scalar_prefetch = 0 : i64, scratch_operands = 0 : i64, tpu.core_type = #tpu.core_type<tc>, window_params = [{transform_indices = @transform_0, window_bounds = array<i64: 16, 32>}, {pipeline_mode = #tpu.pipeline_mode<synchronous>, transform_indices = @transform_1, window_bounds = array<i64: 32, 128>}, {pipeline_mode = #tpu.pipeline_mode<synchronous>, transform_indices = @transform_2, window_bounds = array<i64: 1, 128>}, {pipeline_mode = #tpu.pipeline_mode<synchronous>, transform_indices = @transform_3, window_bounds = array<i64: 128, 128>}, {pipeline_mode = #tpu.pipeline_mode<synchronous>, transform_indices = @transform_4, window_bounds = array<i64: 1, 128>}, {pipeline_mode = #tpu.pipeline_mode<synchronous>, transform_indices = @transform_5, window_bounds = array<i64: 128, 128>}, {pipeline_mode = #tpu.pipeline_mode<synchronous>, transform_indices = @transform_6, window_bounds = array<i64: 1, 128>}, {transform_indices = @transform_7, window_bounds = array<i64: 16, 128>}]} {
    %c0 = arith.constant 0 : index
    %c0_0 = arith.constant 0 : index
    %0 = vector.load %arg1[%c0, %c0_0] : memref<16x32xf32, #tpu.memory_space<vmem>>, vector<16x32xf32>
    %1 = arith.truncf %0 : vector<16x32xf32> to vector<16x32xbf16>
    %c0_1 = arith.constant 0 : index
    %c0_2 = arith.constant 0 : index
    %2 = vector.load %arg2[%c0_1, %c0_2] : memref<32x128xbf16, #tpu.memory_space<vmem>>, vector<32x128xbf16>
    %cst = arith.constant dense<0.000000e+00> : vector<16x128xf32>
    %3 = tpu.matmul %1, %2, %cst {dimension_numbers = #tpu.dot_dimension_numbers<[1], [0], [0], [1], [0, 0, 1, 1], [], []>} : vector<16x32xbf16>, vector<32x128xbf16>, vector<16x128xf32> -> vector<16x128xf32>
    %c0_3 = arith.constant 0 : index
    %c0_4 = arith.constant 0 : index
    %4 = vector.load %arg3[%c0_3, %c0_4] : memref<1x128xf32, #tpu.memory_space<vmem>>, vector<1x128xf32>
    %5 = vector.broadcast %4 : vector<1x128xf32> to vector<16x128xf32>
    %6 = arith.addf %3, %5 : vector<16x128xf32>
    %cst_5 = arith.constant 0.000000e+00 : f32
    %7 = vector.broadcast %cst_5 : f32 to vector<16x128xf32>
    %8 = arith.maximumf %6, %7 : vector<16x128xf32>
    %9 = arith.truncf %8 : vector<16x128xf32> to vector<16x128xbf16>
    %c0_6 = arith.constant 0 : index
    %c0_7 = arith.constant 0 : index
    %10 = vector.load %arg4[%c0_6, %c0_7] : memref<128x128xbf16, #tpu.memory_space<vmem>>, vector<128x128xbf16>
    %cst_8 = arith.constant dense<0.000000e+00> : vector<16x128xf32>
    %11 = tpu.matmul %9, %10, %cst_8 {dimension_numbers = #tpu.dot_dimension_numbers<[1], [0], [0], [1], [0, 0, 1, 1], [], []>} : vector<16x128xbf16>, vector<128x128xbf16>, vector<16x128xf32> -> vector<16x128xf32>
    %c0_9 = arith.constant 0 : index
    %c0_10 = arith.constant 0 : index
    %12 = vector.load %arg5[%c0_9, %c0_10] : memref<1x128xf32, #tpu.memory_space<vmem>>, vector<1x128xf32>
    %13 = vector.broadcast %12 : vector<1x128xf32> to vector<16x128xf32>
    %14 = arith.addf %11, %13 : vector<16x128xf32>
    %cst_11 = arith.constant 0.000000e+00 : f32
    %15 = vector.broadcast %cst_11 : f32 to vector<16x128xf32>
    %16 = arith.maximumf %14, %15 : vector<16x128xf32>
    %17 = arith.truncf %16 : vector<16x128xf32> to vector<16x128xbf16>
    %c0_12 = arith.constant 0 : index
    %c0_13 = arith.constant 0 : index
    %18 = vector.load %arg6[%c0_12, %c0_13] : memref<128x128xbf16, #tpu.memory_space<vmem>>, vector<128x128xbf16>
    %cst_14 = arith.constant dense<0.000000e+00> : vector<16x128xf32>
    %19 = tpu.matmul %17, %18, %cst_14 {dimension_numbers = #tpu.dot_dimension_numbers<[1], [0], [0], [1], [0, 0, 1, 1], [], []>} : vector<16x128xbf16>, vector<128x128xbf16>, vector<16x128xf32> -> vector<16x128xf32>
    %c0_15 = arith.constant 0 : index
    %c0_16 = arith.constant 0 : index
    %20 = vector.load %arg7[%c0_15, %c0_16] : memref<1x128xf32, #tpu.memory_space<vmem>>, vector<1x128xf32>
    %21 = vector.broadcast %20 : vector<1x128xf32> to vector<16x128xf32>
    %22 = arith.addf %19, %21 : vector<16x128xf32>
    %23 = arith.truncf %22 : vector<16x128xf32> to vector<16x128xbf16>
    %c0_17 = arith.constant 0 : index
    %c0_18 = arith.constant 0 : index
    %24 = vector.load %arg8[%c0_17, %c0_18] : memref<16x128xbf16, #tpu.memory_space<vmem>>, vector<16x128xbf16>
    tpu.vector_store %arg8[%c0_17, %c0_18], %23 {strides = array<i32>} : memref<16x128xbf16, #tpu.memory_space<vmem>>, vector<16x128xbf16>,
    return
  }
  func.func @transform_0(%arg0: i32) -> (i32, i32) {
    %c0_i32 = arith.constant 0 : i32
    %c0_i32_0 = arith.constant 0 : i32
    return %arg0, %c0_i32 : i32, i32
  }
  func.func @transform_1(%arg0: i32) -> (i32, i32) {
    %c0_i32 = arith.constant 0 : i32
    %c0_i32_0 = arith.constant 0 : i32
    %c0_i32_1 = arith.constant 0 : i32
    return %c0_i32, %c0_i32_0 : i32, i32
  }
  func.func @transform_2(%arg0: i32) -> (i32, i32) {
    %c0_i32 = arith.constant 0 : i32
    %c0_i32_0 = arith.constant 0 : i32
    %c0_i32_1 = arith.constant 0 : i32
    return %c0_i32, %c0_i32_0 : i32, i32
  }
  func.func @transform_3(%arg0: i32) -> (i32, i32) {
    %c0_i32 = arith.constant 0 : i32
    %c0_i32_0 = arith.constant 0 : i32
    %c0_i32_1 = arith.constant 0 : i32
    return %c0_i32, %c0_i32_0 : i32, i32
  }
  func.func @transform_4(%arg0: i32) -> (i32, i32) {
    %c0_i32 = arith.constant 0 : i32
    %c0_i32_0 = arith.constant 0 : i32
    %c0_i32_1 = arith.constant 0 : i32
    return %c0_i32, %c0_i32_0 : i32, i32
  }
  func.func @transform_5(%arg0: i32) -> (i32, i32) {
    %c0_i32 = arith.constant 0 : i32
    %c0_i32_0 = arith.constant 0 : i32
    %c0_i32_1 = arith.constant 0 : i32
    return %c0_i32, %c0_i32_0 : i32, i32
  }
  func.func @transform_6(%arg0: i32) -> (i32, i32) {
    %c0_i32 = arith.constant 0 : i32
    %c0_i32_0 = arith.constant 0 : i32
    %c0_i32_1 = arith.constant 0 : i32
    return %c0_i32, %c0_i32_0 : i32, i32
  }
  func.func @transform_7(%arg0: i32) -> (i32, i32) {
    %c0_i32 = arith.constant 0 : i32
    %c0_i32_0 = arith.constant 0 : i32
    return %arg0, %c0_i32 : i32, i32
  }
}

</mosaic_0001>

<llo_original>
// kernel: categorical_actor_forward.1
$region0: #{categorical_actor_forward.1}
  #allocation0 [shape = 'u32[]', space=smem, size = 0x4, offset = 0x4, fixed_abs, tag = 'smem constant byte address 0x4 - core index']
  #allocation1 [shape = 'u32[144,128]{1,0:T(1,128)}', space=vmem, size = 0x12000, scoped, tag = 'internal scratch']
  %s0 = inlined_call_operand.vmem [shape: f32[16,32], index: 0, kind: input, shape index: {}]
  %s1 = inlined_call_operand.vmem [shape: bf16[32,128], index: 1, kind: input, shape index: {}]
  %s2 = inlined_call_operand.vmem [shape: f32[1,128], index: 2, kind: input, shape index: {}]
  %s3 = inlined_call_operand.hbm [shape: bf16[128,128], index: 3, kind: input, shape index: {}]
  %s4 = inlined_call_operand.vmem [shape: f32[1,128], index: 4, kind: input, shape index: {}]
  %s5 = inlined_call_operand.hbm [shape: bf16[128,128], index: 5, kind: input, shape index: {}]
  %s6 = inlined_call_operand.vmem [shape: f32[1,128], index: 6, kind: input, shape index: {}]
  %s7 = inlined_call_operand.vmem [shape: bf16[16,128], index: 7, kind: output, shape index: {}]
  %s8 = sld [smem:[#allocation0]]
  $region46: #{categorical_actor_forward.1} parent=0
    _
  %s10 = ssub.s32 1, %s8
  %s11 = scalar_select 0, %s10, %s8
  $region1: #{categorical_actor_forward.1} parent=0
    #allocation2 [shape = 'u8[32768]{0}', space=vmem, size = 0x8000, scoped, tag = 'input window, operand 3, single buffered']
    #allocation3 [shape = 's32[1]{0}', space=sflag, size = 0x4, scoped, tag = 'scoped memory for categorical_actor_forward.1']
    #allocation4 [shape = 'u8[32768]{0}', space=vmem, size = 0x8000, scoped, tag = 'input window, operand 5, single buffered']
    #allocation5 [shape = 's32[1]{0}', space=sflag, size = 0x4, scoped, tag = 'scoped memory for categorical_actor_forward.1']
    %12 = vsyncpa [#allocation3], 0
    %13 = vsyncpa [#allocation5], 0
    // Predicated region
    $region2: #{categorical_actor_forward.1} parent=1 // pred_check
      _
    $region3: #{categorical_actor_forward.1} parent=1 // pred_check_branch
      %15 = sbr.rel (0) target = $region5
    $region4: #{categorical_actor_forward.1} parent=1 // pred_region
      _
    $region5: #{categorical_actor_forward.1} parent=1 // pred_fallthru
      _
    // Predicated region
    $region6: #{categorical_actor_forward.1} parent=1 // pred_check
      _
    $region7: #{categorical_actor_forward.1} parent=1 // pred_check_branch
      %17 = sbr.rel (0) target = $region9
    $region8: #{categorical_actor_forward.1} parent=1 // pred_region
      _
    $region9: #{categorical_actor_forward.1} parent=1 // pred_fallthru
      _
    // Predicated region
    $region10: #{categorical_actor_forward.1} parent=1 // pred_check
      _
    $region11: #{categorical_actor_forward.1} parent=1 // pred_check_branch
      %19 = sbr.rel (0) target = $region13
    $region12: #{categorical_actor_forward.1} parent=1 // pred_region
      _
    $region13: #{categorical_actor_forward.1} parent=1 // pred_fallthru
      _
    // Predicated region
    $region14: #{categorical_actor_forward.1} parent=1 // pred_check
      _
    $region15: #{categorical_actor_forward.1} parent=1 // pred_check_branch
      %21 = sbr.rel (0) target = $region17
    $region16: #{categorical_actor_forward.1} parent=1 // pred_region
      %s23 = ssub.s32 1024, 1024
      %24 = vsyncadd [#allocation3], %s23
      %s25 = sshll.u32 [#allocation2], 4
      %s26 = int_to_ptr.vmem [resolvable:$true] %s25
      %31 = dma.hbm_to_vmem [thread:$0]  %s3, 1024, %s26, [#allocation3], 64, 64, 4
    $region17: #{categorical_actor_forward.1} parent=1 // pred_fallthru
      _
    // Predicated region
    $region18: #{categorical_actor_forward.1} parent=1 // pred_check
      _
    $region19: #{categorical_actor_forward.1} parent=1 // pred_check_branch
      %33 = sbr.rel (0) target = $region21
    $region20: #{categorical_actor_forward.1} parent=1 // pred_region
      _
    $region21: #{categorical_actor_forward.1} parent=1 // pred_fallthru
      _
    // Predicated region
    $region22: #{categorical_actor_forward.1} parent=1 // pred_check
      _
    $region23: #{categorical_actor_forward.1} parent=1 // pred_check_branch
      %35 = sbr.rel (0) target = $region25
    $region24: #{categorical_actor_forward.1} parent=1 // pred_region
      %s37 = ssub.s32 1024, 1024
      %38 = vsyncadd [#allocation5], %s37
      %s39 = sshll.u32 [#allocation4], 4
      %s40 = int_to_ptr.vmem [resolvable:$true] %s39
      %45 = dma.hbm_to_vmem [thread:$0]  %s5, 1024, %s40, [#allocation5], 64, 64, 4
    $region25: #{categorical_actor_forward.1} parent=1 // pred_fallthru
      _
    // Predicated region
    $region26: #{categorical_actor_forward.1} parent=1 // pred_check
      _
    $region27: #{categorical_actor_forward.1} parent=1 // pred_check_branch
      %47 = sbr.rel (0) target = $region29
    $region28: #{categorical_actor_forward.1} parent=1 // pred_region
      _
    $region29: #{categorical_actor_forward.1} parent=1 // pred_fallthru
      _
    // Predicated region
    $region30: #{categorical_actor_forward.1} parent=1 // pred_check
      _
    $region31: #{categorical_actor_forward.1} parent=1 // pred_check_branch
      %49 = sbr.rel (0) target = $region33
    $region32: #{categorical_actor_forward.1} parent=1 // pred_region
      %50 = dma.done [#allocation3], 1024
    $region33: #{categorical_actor_forward.1} parent=1 // pred_fallthru
      _
    // Predicated region
    $region34: #{categorical_actor_forward.1} parent=1 // pred_check
      _
    $region35: #{categorical_actor_forward.1} parent=1 // pred_check_branch
      %52 = sbr.rel (0) target = $region37
    $region36: #{categorical_actor_forward.1} parent=1 // pred_region
      %53 = dma.done [#allocation5], 1024
    $region37: #{categorical_actor_forward.1} parent=1 // pred_fallthru
      _
    %v55 = vld [vmem:[%s0] sm:$0xff]
    %v56 = vld [vmem:[%s0 + $0x8] sm:$0xff]
    %v57 = vpack.c.bf16 %v56, %v55
    %v58 = vld [vmem:[%s1] sm:$0xf]
    %v59 = vld [vmem:[%s1 + $0x4] sm:$0xf]
    %v60 = vld [vmem:[%s1 + $0x8] sm:$0xf]
    %v61 = vld [vmem:[%s1 + $0xc] sm:$0xf]
    %v62 = vld [vmem:[%s2] sm:$0x1]
    %v64 = vlaneseq
    %v65 = vshrl.u32 %v64, 7
    %v66 = vsub.s32 0, %v65
    %v67 = vrot.slane %v62, %v66
    %v73 = vunpack.c.l.b16 %v58
    %v74 = vunpack.c.l.b16 %v59
    %v75 = vunpack.c.l.b16 %v60
    %v76 = vunpack.c.l.b16 %v61
    %v77 = vpack.c.b16 %v74, %v73
    %v78 = vpack.c.b16 %v76, %v75
    %vm81 = vcmask 261120
    %v83 = vsel %vm81, %v57, 0
    %85 = vmatprep.subr.bf16.mxu0 0
    %86 = vmatpush1.bf16.msra.mxu0 0
    %87 = vmatprep.subr.bf16.mxu0 0
    %88 = vmatpush1.bf16.msra.mxu0 0
    %89 = vmatprep.subr.bf16.mxu0 0
    %90 = vmatpush1.bf16.msra.mxu0 0
    %91 = vmatprep.subr.bf16.mxu0 0
    %92 = vmatpush1.bf16.msra.mxu0 0
    %93 = vmatprep.subr.bf16.mxu0 0
    %94 = vmatpush1.bf16.msra.mxu0 0
    %95 = vmatprep.subr.bf16.mxu0 0
    %96 = vmatpush1.bf16.msra.mxu0 0
    %97 = vmatprep.subr.bf16.mxu0 0
    %98 = vmatpush1.bf16.msra.mxu0 %v78
    %99 = vmatprep.subr.bf16.mxu0 0
    %100 = vmatpush1.bf16.msra.mxu0 %v77
    %101 = vmatprep.subr.bf16.mxu0 0
    %102 = vmatpush2.bf16.msra.mxu0 0
    %103 = vmatprep.subr.bf16.mxu0 0
    %104 = vmatpush2.bf16.msra.mxu0 0
    %105 = vmatprep.subr.bf16.mxu0 0
    %106 = vmatpush2.bf16.msra.mxu0 0
    %107 = vmatprep.subr.bf16.mxu0 0
    %108 = vmatpush2.bf16.msra.mxu0 0
    %109 = vmatprep.subr.bf16.mxu0 0
    %110 = vmatpush2.bf16.msra.mxu0 0
    %111 = vmatprep.subr.bf16.mxu0 0
    %112 = vmatpush2.bf16.msra.mxu0 0
    %113 = vmatprep.subr.bf16.mxu0 0
    %114 = vmatpush2.bf16.msra.mxu0 0
    %115 = vmatprep.subr.bf16.mxu0 0
    %116 = vmatpush2.bf16.msra.mxu0 0
    %117 = vmatprep.mubr.bf16.mxu0 0
    %118 = vmatmul.mubr.bf16.gmra.mxu0 %v83
    %v119 = vpop.f32.mrf.mxu0
    %v120 = vadd.f32 %v67, %v119
    %v121 = vpop.f32.mrf.mxu0
    %v122 = vpop.f32.mrf.mxu0
    %v123 = vadd.f32 %v67, %v122
    %v124 = vpop.f32.mrf.mxu0
    %125 = vdwg.mxu0
    %v126 = vmax.f32 %v120, 0.0
    %v127 = vmax.f32 %v123, 0.0
    %v128 = vpack.c.bf16 %v127, %v126
    %v129 = vld [vmem:[#allocation2] sm:$0xf]
    %v130 = vld [vmem:[#allocation2 + $0x4] sm:$0xf]
    %v131 = vld [vmem:[#allocation2 + $0x8] sm:$0xf]
    %v132 = vld [vmem:[#allocation2 + $0xc] sm:$0xf]
    %v133 = vld [vmem:[#allocation2 + $0x10] sm:$0xf]
    %v134 = vld [vmem:[#allocation2 + $0x14] sm:$0xf]
    %v135 = vld [vmem:[#allocation2 + $0x18] sm:$0xf]
    %v136 = vld [vmem:[#allocation2 + $0x1c] sm:$0xf]
    %v137 = vld [vmem:[#allocation2 + $0x20] sm:$0xf]
    %v138 = vld [vmem:[#allocation2 + $0x24] sm:$0xf]
    %v139 = vld [vmem:[#allocation2 + $0x28] sm:$0xf]
    %v140 = vld [vmem:[#allocation2 + $0x2c] sm:$0xf]
    %v141 = vld [vmem:[#allocation2 + $0x30] sm:$0xf]
    %v142 = vld [vmem:[#allocation2 + $0x34] sm:$0xf]
    %v143 = vld [vmem:[#allocation2 + $0x38] sm:$0xf]
    %v144 = vld [vmem:[#allocation2 + $0x3c] sm:$0xf]
    %v145 = vld [vmem:[%s4] sm:$0x1]
    %v147 = vlaneseq
    %v148 = vshrl.u32 %v147, 7
    %v149 = vsub.s32 0, %v148
    %v150 = vrot.slane %v145, %v149
    %v168 = vunpack.c.l.b16 %v129
    %v169 = vunpack.c.l.b16 %v130
    %v170 = vunpack.c.l.b16 %v131
    %v171 = vunpack.c.l.b16 %v132
    %v172 = vunpack.c.l.b16 %v133
    %v173 = vunpack.c.l.b16 %v134
    %v174 = vunpack.c.l.b16 %v135
    %v175 = vunpack.c.l.b16 %v136
    %v176 = vunpack.c.l.b16 %v137
    %v177 = vunpack.c.l.b16 %v138
    %v178 = vunpack.c.l.b16 %v139
    %v179 = vunpack.c.l.b16 %v140
    %v180 = vunpack.c.l.b16 %v141
    %v181 = vunpack.c.l.b16 %v142
    %v182 = vunpack.c.l.b16 %v143
    %v183 = vunpack.c.l.b16 %v144
    %v184 = vpack.c.b16 %v169, %v168
    %v185 = vpack.c.b16 %v171, %v170
    %v186 = vpack.c.b16 %v173, %v172
    %v187 = vpack.c.b16 %v175, %v174
    %v188 = vpack.c.b16 %v177, %v176
    %v189 = vpack.c.b16 %v179, %v178
    %v190 = vpack.c.b16 %v181, %v180
    %v191 = vpack.c.b16 %v183, %v182
    %200 = vmatprep.subr.bf16.mxu0 0
    %201 = vmatpush1.bf16.msra.mxu0 %v191
    %202 = vmatprep.subr.bf16.mxu0 0
    %203 = vmatpush1.bf16.msra.mxu0 %v190
    %204 = vmatprep.subr.bf16.mxu0 0
    %205 = vmatpush1.bf16.msra.mxu0 %v189
    %206 = vmatprep.subr.bf16.mxu0 0
    %207 = vmatpush1.bf16.msra.mxu0 %v188
    %208 = vmatprep.subr.bf16.mxu0 0
    %209 = vmatpush1.bf16.msra.mxu0 %v187
    %210 = vmatprep.subr.bf16.mxu0 0
    %211 = vmatpush1.bf16.msra.mxu0 %v186
    %212 = vmatprep.subr.bf16.mxu0 0
    %213 = vmatpush1.bf16.msra.mxu0 %v185
    %214 = vmatprep.subr.bf16.mxu0 0
    %215 = vmatpush1.bf16.msra.mxu0 %v184
    %216 = vmatprep.subr.bf16.mxu0 0
    %217 = vmatpush2.bf16.msra.mxu0 0
    %218 = vmatprep.subr.bf16.mxu0 0
    %219 = vmatpush2.bf16.msra.mxu0 0
    %220 = vmatprep.subr.bf16.mxu0 0
    %221 = vmatpush2.bf16.msra.mxu0 0
    %222 = vmatprep.subr.bf16.mxu0 0
    %223 = vmatpush2.bf16.msra.mxu0 0
    %224 = vmatprep.subr.bf16.mxu0 0
    %225 = vmatpush2.bf16.msra.mxu0 0
    %226 = vmatprep.subr.bf16.mxu0 0
    %227 = vmatpush2.bf16.msra.mxu0 0
    %228 = vmatprep.subr.bf16.mxu0 0
    %229 = vmatpush2.bf16.msra.mxu0 0
    %230 = vmatprep.subr.bf16.mxu0 0
    %231 = vmatpush2.bf16.msra.mxu0 0
    %232 = vmatprep.mubr.bf16.mxu0 0
    %233 = vmatmul.mubr.bf16.gmra.mxu0 %v128
    %v234 = vpop.f32.mrf.mxu0
    %v235 = vadd.f32 %v150, %v234
    %v236 = vpop.f32.mrf.mxu0
    %v237 = vpop.f32.mrf.mxu0
    %v238 = vadd.f32 %v150, %v237
    %v239 = vpop.f32.mrf.mxu0
    %240 = vdwg.mxu0
    %v241 = vmax.f32 %v235, 0.0
    %v242 = vmax.f32 %v238, 0.0
    %v243 = vpack.c.bf16 %v242, %v241
    %v244 = vld [vmem:[#allocation4] sm:$0xf]
    %v245 = vld [vmem:[#allocation4 + $0x4] sm:$0xf]
    %v246 = vld [vmem:[#allocation4 + $0x8] sm:$0xf]
    %v247 = vld [vmem:[#allocation4 + $0xc] sm:$0xf]
    %v248 = vld [vmem:[#allocation4 + $0x10] sm:$0xf]
    %v249 = vld [vmem:[#allocation4 + $0x14] sm:$0xf]
    %v250 = vld [vmem:[#allocation4 + $0x18] sm:$0xf]
    %v251 = vld [vmem:[#allocation4 + $0x1c] sm:$0xf]
    %v252 = vld [vmem:[#allocation4 + $0x20] sm:$0xf]
    %v253 = vld [vmem:[#allocation4 + $0x24] sm:$0xf]
    %v254 = vld [vmem:[#allocation4 + $0x28] sm:$0xf]
    %v255 = vld [vmem:[#allocation4 + $0x2c] sm:$0xf]
    %v256 = vld [vmem:[#allocation4 + $0x30] sm:$0xf]
    %v257 = vld [vmem:[#allocation4 + $0x34] sm:$0xf]
    %v258 = vld [vmem:[#allocation4 + $0x38] sm:$0xf]
    %v259 = vld [vmem:[#allocation4 + $0x3c] sm:$0xf]
    %v260 = vld [vmem:[%s6] sm:$0x1]
    %v262 = vlaneseq
    %v263 = vshrl.u32 %v262, 7
    %v264 = vsub.s32 0, %v263
    %v265 = vrot.slane %v260, %v264
    %v283 = vunpack.c.l.b16 %v244
    %v284 = vunpack.c.l.b16 %v245
    %v285 = vunpack.c.l.b16 %v246
    %v286 = vunpack.c.l.b16 %v247
    %v287 = vunpack.c.l.b16 %v248
    %v288 = vunpack.c.l.b16 %v249
    %v289 = vunpack.c.l.b16 %v250
    %v290 = vunpack.c.l.b16 %v251
    %v291 = vunpack.c.l.b16 %v252
    %v292 = vunpack.c.l.b16 %v253
    %v293 = vunpack.c.l.b16 %v254
    %v294 = vunpack.c.l.b16 %v255
    %v295 = vunpack.c.l.b16 %v256
    %v296 = vunpack.c.l.b16 %v257
    %v297 = vunpack.c.l.b16 %v258
    %v298 = vunpack.c.l.b16 %v259
    %v299 = vpack.c.b16 %v284, %v283
    %v300 = vpack.c.b16 %v286, %v285
    %v301 = vpack.c.b16 %v288, %v287
    %v302 = vpack.c.b16 %v290, %v289
    %v303 = vpack.c.b16 %v292, %v291
    %v304 = vpack.c.b16 %v294, %v293
    %v305 = vpack.c.b16 %v296, %v295
    %v306 = vpack.c.b16 %v298, %v297
    %315 = vmatprep.subr.bf16.mxu0 0
    %316 = vmatpush1.bf16.msra.mxu0 %v306
    %317 = vmatprep.subr.bf16.mxu0 0
    %318 = vmatpush1.bf16.msra.mxu0 %v305
    %319 = vmatprep.subr.bf16.mxu0 0
    %320 = vmatpush1.bf16.msra.mxu0 %v304
    %321 = vmatprep.subr.bf16.mxu0 0
    %322 = vmatpush1.bf16.msra.mxu0 %v303
    %323 = vmatprep.subr.bf16.mxu0 0
    %324 = vmatpush1.bf16.msra.mxu0 %v302
    %325 = vmatprep.subr.bf16.mxu0 0
    %326 = vmatpush1.bf16.msra.mxu0 %v301
    %327 = vmatprep.subr.bf16.mxu0 0
    %328 = vmatpush1.bf16.msra.mxu0 %v300
    %329 = vmatprep.subr.bf16.mxu0 0
    %330 = vmatpush1.bf16.msra.mxu0 %v299
    %331 = vmatprep.subr.bf16.mxu0 0
    %332 = vmatpush2.bf16.msra.mxu0 0
    %333 = vmatprep.subr.bf16.mxu0 0
    %334 = vmatpush2.bf16.msra.mxu0 0
    %335 = vmatprep.subr.bf16.mxu0 0
    %336 = vmatpush2.bf16.msra.mxu0 0
    %337 = vmatprep.subr.bf16.mxu0 0
    %338 = vmatpush2.bf16.msra.mxu0 0
    %339 = vmatprep.subr.bf16.mxu0 0
    %340 = vmatpush2.bf16.msra.mxu0 0
    %341 = vmatprep.subr.bf16.mxu0 0
    %342 = vmatpush2.bf16.msra.mxu0 0
    %343 = vmatprep.subr.bf16.mxu0 0
    %344 = vmatpush2.bf16.msra.mxu0 0
    %345 = vmatprep.subr.bf16.mxu0 0
    %346 = vmatpush2.bf16.msra.mxu0 0
    %347 = vmatprep.mubr.bf16.mxu0 0
    %348 = vmatmul.mubr.bf16.gmra.mxu0 %v243
    %v349 = vpop.f32.mrf.mxu0
    %v350 = vadd.f32 %v265, %v349
    %v351 = vpop.f32.mrf.mxu0
    %v352 = vpop.f32.mrf.mxu0
    %v353 = vadd.f32 %v265, %v352
    %v354 = vpop.f32.mrf.mxu0
    %355 = vdwg.mxu0
    %v356 = vpack.c.bf16 %v353, %v350
    %v358 = vunpack.c.l.b16 %v356
    %v359 = vunpack.c.h.b16 %v356
    %v360 = vpack.c.b16 %v358, %v358
    %v361 = vpack.c.b16 %v359, %v359
    %364 = vst [vmem:[%s7] sm:$0xf] %v360
    %365 = vst [vmem:[%s7 + $0x4] sm:$0xf] %v361
    // Predicated region
    $region38: #{categorical_actor_forward.1} parent=1 // pred_check
      _
    $region39: #{categorical_actor_forward.1} parent=1 // pred_check_branch
      %367 = sbr.rel (0) target = $region41
    $region40: #{categorical_actor_forward.1} parent=1 // pred_region
      _
    $region41: #{categorical_actor_forward.1} parent=1 // pred_fallthru
      _
    // Predicated region
    $region42: #{categorical_actor_forward.1} parent=1 // pred_check
      _
    $region43: #{categorical_actor_forward.1} parent=1 // pred_check_branch
      %369 = sbr.rel (0) target = $region45
    $region44: #{categorical_actor_forward.1} parent=1 // pred_region
      _
    $region45: #{categorical_actor_forward.1} parent=1 // pred_fallthru
      _
    %370 = vsyncpa [#allocation3], 1
    %371 = vsyncpa [#allocation5], 1

</llo_original>
